<compile_context>
chip_gen: v7x
topology: tpu7x:2x2x1
jax: 0.10.0
libtpu: 0.0.40
codegen_flags: <defaults>
</compile_context>

<pallas_src>
import functools
import math

import jax
import jax.numpy as jnp
from jax import lax
from jax.experimental import pallas as pl
from jax.experimental.pallas import tpu as pltpu


def _round_up(v, m):
    return (v + m - 1) // m * m


def _vmem_capacity_bytes():
    try:
        return int(pltpu.get_tpu_info().vmem_capacity_bytes)
    except Exception:
        return 64 * 1024 * 1024  # conservative fallback (v7x per-core VMEM)


def _conv_token_embed_kernel(x_ref, w_ref, o_ref, *, compute_dtype, unroll):
    """x_ref: (c_in, tile_p, l_patch) input dtype; w_ref: (c_in, l_patch, d_model)
    compute_dtype (VMEM-resident); o_ref: (d_model, tile_p) out dtype."""
    c_in, tile_p, _ = x_ref.shape
    d_model = w_ref.shape[2]

    def partial_dot(c):
        # in-kernel cast of x (no wrapper-side materialized bf16 copy of activations)
        return jnp.dot(x_ref[c].astype(compute_dtype), w_ref[c],
                       preferred_element_type=jnp.float32)

    if unroll:
        acc = partial_dot(0)
        for c in range(1, c_in):
            acc = acc + partial_dot(c)
    else:
        acc = lax.fori_loop(
            0, c_in, lambda c, a: a + partial_dot(c),
            jnp.zeros((tile_p, d_model), jnp.float32))

    # NCHW orientation: d_model on sublanes, patch index on lanes (one XLU transpose,
    # free next to the MXU/DMA) -> no post-kernel HBM transpose pass.
    o_ref[...] = acc.T.astype(o_ref.dtype)


@functools.partial(
    jax.jit,
    static_argnames=("l_patch", "stride", "compute_dtype", "out_dtype", "max_tile_p"),
)
def cross_channel_token_embedding(
    x, weight, *, l_patch, stride=None, compute_dtype=jnp.bfloat16,
    out_dtype=None, max_tile_p=1024,
):
    """x: (B, 1, c_in, L); weight: (d_model, 1, c_in, l_patch).

    Returns (B, d_model, 1, n_patches), matching the PyTorch Conv2d forward.
    Output dtype defaults to compute_dtype (bf16) to halve output HBM writes;
    pass out_dtype=jnp.float32 for a full-precision result.
    """
    if stride is None:
        stride = l_patch
    if out_dtype is None:
        out_dtype = compute_dtype
    B, one, c_in, L = x.shape
    assert one == 1
    d_model = weight.shape[0]
    n_patches = (L - l_patch) // stride + 1

    # ---- activations: natural (B, c_in, n_patches, l_patch) layout, original dtype ----
    xs = x[:, 0]                                                   # (B, c_in, L)
    if stride == l_patch:
        if n_patches * l_patch != L:
            xs = xs[:, :, : n_patches * l_patch]
        patches = xs.reshape(B, c_in, n_patches, l_patch)          # metadata-only
    else:
        # TODO(synk): overlapping patches (stride != l_patch) are materialized by an
        # XLA gather outside the kernel (up to l_patch/stride x activation duplication).
        starts = jnp.arange(n_patches) * stride
        idx = starts[:, None] + jnp.arange(l_patch)[None, :]
        patches = xs[:, :, idx]                                    # (B, c_in, P, l_patch)

    # ---- tiny weight: (d_model, 1, c_in, l_patch) -> (c_in, l_patch, d_model) ----
    w = jnp.transpose(weight[:, 0], (1, 2, 0)).astype(compute_dtype)

    x_isz = jnp.dtype(patches.dtype).itemsize
    w_isz = jnp.dtype(compute_dtype).itemsize
    o_isz = jnp.dtype(out_dtype).itemsize

    # ---- tile_p / VMEM budget (generation-aware: 128 MiB v5e/v6e, 64 MiB v7x) ----
    max_tile_p = max(128, (max_tile_p // 128) * 128)
    capacity = _vmem_capacity_bytes()
    budget = (capacity * 3) // 4                                   # leave headroom

    def footprint(tp):                                             # (8,128)-tiled VMEM bytes
        xb = 2 * c_in * _round_up(tp, 8) * _round_up(l_patch, 128) * x_isz
        wb = 2 * c_in * _round_up(l_patch, 8) * _round_up(d_model, 128) * w_isz
        ob = 2 * _round_up(d_model, 8) * _round_up(tp, 128) * o_isz
        return xb + wb + ob

    if n_patches <= max_tile_p and footprint(n_patches) <= budget:
        tile_p = n_patches                                         # full dim: always legal
    else:
        tile_p = max(128, (min(max_tile_p, n_patches) // 128) * 128)
        while tile_p > 128 and footprint(tile_p) > budget:
            tile_p -= 128
    # megacore (v7x has 2 TensorCores): keep >= 2 parallel grid steps when possible
    if B == 1 and tile_p >= n_patches and n_patches >= 256:
        tile_p = _round_up(pl.cdiv(n_patches, 2), 128)
    # keep the output's last block dim (8,128)-legal when it is not the full dim
    if tile_p == n_patches and n_patches % 8 != 0:
        tile_p = _round_up(n_patches, 128)                         # single partial block

    vmem_limit = int(min(budget, max(2 * footprint(tile_p), 16 * 1024 * 1024)))

    cost = pl.CostEstimate(
        flops=2 * B * n_patches * c_in * l_patch * d_model,
        transcendentals=0,
        bytes_accessed=patches.size * x_isz + w.size * w_isz
        + B * d_model * n_patches * o_isz,
    )

    kernel = functools.partial(
        _conv_token_embed_kernel, compute_dtype=compute_dtype, unroll=c_in <= 16)

    out = pl.pallas_call(
        kernel,
        out_shape=jax.ShapeDtypeStruct((B, d_model, n_patches), out_dtype),
        grid_spec=pltpu.PrefetchScalarGridSpec(
            num_scalar_prefetch=0,
            grid=(B, pl.cdiv(n_patches, tile_p)),
            in_specs=[
                # x: (B, c_in, n_patches, l_patch) -> kernel sees (c_in, tile_p, l_patch)
                pl.BlockSpec((None, c_in, tile_p, l_patch), lambda b, j: (b, 0, j, 0)),
                # weight: whole tensor, constant block index -> DMA'd once, VMEM-resident
                pl.BlockSpec((c_in, l_patch, d_model), lambda b, j: (0, 0, 0)),
            ],
            # NCHW output; patch index is the lane axis of the stores
            out_specs=pl.BlockSpec((None, d_model, tile_p), lambda b, j: (b, 0, j)),
        ),
        compiler_params=pltpu.CompilerParams(
            dimension_semantics=("parallel", "parallel"),
            vmem_limit_bytes=vmem_limit,
        ),
        cost_estimate=cost,
    )(patches, w)

    return out[:, :, None, :]                                      # (B, d_model, 1, P)


def init_conv_weight(key, d_model, c_in, l_patch):
    """kaiming_normal_(mode='fan_in', nonlinearity='leaky_relu') for
    Conv2d(1, d_model, (c_in, l_patch)); fan_in = 1 * c_in * l_patch."""
    fan_in = 1 * c_in * l_patch
    negative_slope = 0.01  # PyTorch default slope used by kaiming init for leaky_relu
    gain = math.sqrt(2.0 / (1.0 + negative_slope ** 2))
    std = gain / math.sqrt(fan_in)
    return std * jax.random.normal(key, (d_model, 1, c_in, l_patch), dtype=jnp.float32)


if __name__ == "__main__":
    # Small shapes consistent with the module's forward.
    B, c_in, L = 2, 4, 64
    l_patch = 8
    stride = l_patch          # module default: stride = l_patch
    d_model = 128

    key = jax.random.PRNGKey(0)
    kx, kw = jax.random.split(key)
    x = jax.random.normal(kx, (B, 1, c_in, L), dtype=jnp.float32)
    weight = init_conv_weight(kw, d_model, c_in, l_patch)

    # pure-JAX reference (valid conv as an einsum over patches)
    n_patches = (L - l_patch) // stride + 1
    starts = jnp.arange(n_patches) * stride
    idx = starts[:, None] + jnp.arange(l_patch)[None, :]
    ref_patches = jnp.transpose(x[:, 0][:, :, idx], (0, 2, 1, 3))   # (B, P, c_in, l_patch)
    ref = jnp.einsum("bpcl,dcl->bdp", ref_patches, weight[:, 0])[:, :, None, :]

    # f32-compute path: structural / numerical check
    y32 = cross_channel_token_embedding(
        x, weight, l_patch=l_patch, stride=stride,
        compute_dtype=jnp.float32, out_dtype=jnp.float32)
    y32 = jax.block_until_ready(y32)
    assert y32.shape == (B, d_model, 1, n_patches), y32.shape
    assert jnp.allclose(y32, ref, atol=1e-4, rtol=1e-4), \
        float(jnp.max(jnp.abs(y32 - ref)))

    # default path: bf16 operands + bf16 output, f32 accumulation
    y = cross_channel_token_embedding(x, weight, l_patch=l_patch, stride=stride)
    y = jax.block_until_ready(y)
    assert y.shape == (B, d_model, 1, n_patches), y.shape
    assert y.dtype == jnp.bfloat16, y.dtype
    err = float(jnp.max(jnp.abs(y.astype(jnp.float32) - ref)))
    assert jnp.allclose(y.astype(jnp.float32), ref, atol=1e-1, rtol=1e-1), err

    print("KERNEL_OK")
</pallas_src>

<mosaic_0001>
module attributes {stable_mosaic.version = 11 : i64} {
  func.func @_conv_token_embed_kernel(%arg0: i32, %arg1: i32, %arg2: memref<1x4x8x8xf32, #tpu.memory_space<vmem>>, %arg3: memref<4x8x128xf32, #tpu.memory_space<vmem>>, %arg4: memref<1x128x8xf32, #tpu.memory_space<vmem>>) attributes {dimension_semantics = [#tpu.dimension_semantics<parallel>, #tpu.dimension_semantics<parallel>], iteration_bounds = array<i64: 2, 1>, scalar_prefetch = 0 : i64, scratch_operands = 0 : i64, tpu.core_type = #tpu.core_type<tc>, window_params = [{transform_indices = @transform_0, window_bounds = array<i64: 1, 4, 8, 8>}, {pipeline_mode = #tpu.pipeline_mode<synchronous>, transform_indices = @transform_1, window_bounds = array<i64: 4, 8, 128>}, {transform_indices = @transform_2, window_bounds = array<i64: 1, 128, 8>}]} {
    %c0 = arith.constant 0 : index
    %c0_0 = arith.constant 0 : index
    %c0_1 = arith.constant 0 : index
    %c0_2 = arith.constant 0 : index
    %0 = vector.load %arg2[%c0, %c0_0, %c0_1, %c0_2] : memref<1x4x8x8xf32, #tpu.memory_space<vmem>>, vector<1x1x8x8xf32>
    %1 = vector.shape_cast %0 : vector<1x1x8x8xf32> to vector<8x8xf32>
    %c0_3 = arith.constant 0 : index
    %c0_4 = arith.constant 0 : index
    %c0_5 = arith.constant 0 : index
    %2 = vector.load %arg3[%c0_3, %c0_4, %c0_5] : memref<4x8x128xf32, #tpu.memory_space<vmem>>, vector<1x8x128xf32>
    %3 = vector.shape_cast %2 : vector<1x8x128xf32> to vector<8x128xf32>
    %cst = arith.constant dense<0.000000e+00> : vector<8x128xf32>
    %4 = tpu.matmul %1, %3, %cst {dimension_numbers = #tpu.dot_dimension_numbers<[1], [0], [0], [1], [0, 0, 1, 1], [], []>} : vector<8x8xf32>, vector<8x128xf32>, vector<8x128xf32> -> vector<8x128xf32>
    %c0_6 = arith.constant 0 : index
    %c1 = arith.constant 1 : index
    %c0_7 = arith.constant 0 : index
    %c0_8 = arith.constant 0 : index
    %5 = vector.load %arg2[%c0_6, %c1, %c0_7, %c0_8] : memref<1x4x8x8xf32, #tpu.memory_space<vmem>>, vector<1x1x8x8xf32>
    %6 = vector.shape_cast %5 : vector<1x1x8x8xf32> to vector<8x8xf32>
    %c1_9 = arith.constant 1 : index
    %c0_10 = arith.constant 0 : index
    %c0_11 = arith.constant 0 : index
    %7 = vector.load %arg3[%c1_9, %c0_10, %c0_11] : memref<4x8x128xf32, #tpu.memory_space<vmem>>, vector<1x8x128xf32>
    %8 = vector.shape_cast %7 : vector<1x8x128xf32> to vector<8x128xf32>
    %cst_12 = arith.constant dense<0.000000e+00> : vector<8x128xf32>
    %9 = tpu.matmul %6, %8, %cst_12 {dimension_numbers = #tpu.dot_dimension_numbers<[1], [0], [0], [1], [0, 0, 1, 1], [], []>} : vector<8x8xf32>, vector<8x128xf32>, vector<8x128xf32> -> vector<8x128xf32>
    %10 = arith.addf %4, %9 : vector<8x128xf32>
    %c0_13 = arith.constant 0 : index
    %c2 = arith.constant 2 : index
    %c0_14 = arith.constant 0 : index
    %c0_15 = arith.constant 0 : index
    %11 = vector.load %arg2[%c0_13, %c2, %c0_14, %c0_15] : memref<1x4x8x8xf32, #tpu.memory_space<vmem>>, vector<1x1x8x8xf32>
    %12 = vector.shape_cast %11 : vector<1x1x8x8xf32> to vector<8x8xf32>
    %c2_16 = arith.constant 2 : index
    %c0_17 = arith.constant 0 : index
    %c0_18 = arith.constant 0 : index
    %13 = vector.load %arg3[%c2_16, %c0_17, %c0_18] : memref<4x8x128xf32, #tpu.memory_space<vmem>>, vector<1x8x128xf32>
    %14 = vector.shape_cast %13 : vector<1x8x128xf32> to vector<8x128xf32>
    %cst_19 = arith.constant dense<0.000000e+00> : vector<8x128xf32>
    %15 = tpu.matmul %12, %14, %cst_19 {dimension_numbers = #tpu.dot_dimension_numbers<[1], [0], [0], [1], [0, 0, 1, 1], [], []>} : vector<8x8xf32>, vector<8x128xf32>, vector<8x128xf32> -> vector<8x128xf32>
    %16 = arith.addf %10, %15 : vector<8x128xf32>
    %c0_20 = arith.constant 0 : index
    %c3 = arith.constant 3 : index
    %c0_21 = arith.constant 0 : index
    %c0_22 = arith.constant 0 : index
    %17 = vector.load %arg2[%c0_20, %c3, %c0_21, %c0_22] : memref<1x4x8x8xf32, #tpu.memory_space<vmem>>, vector<1x1x8x8xf32>
    %18 = vector.shape_cast %17 : vector<1x1x8x8xf32> to vector<8x8xf32>
    %c3_23 = arith.constant 3 : index
    %c0_24 = arith.constant 0 : index
    %c0_25 = arith.constant 0 : index
    %19 = vector.load %arg3[%c3_23, %c0_24, %c0_25] : memref<4x8x128xf32, #tpu.memory_space<vmem>>, vector<1x8x128xf32>
    %20 = vector.shape_cast %19 : vector<1x8x128xf32> to vector<8x128xf32>
    %cst_26 = arith.constant dense<0.000000e+00> : vector<8x128xf32>
    %21 = tpu.matmul %18, %20, %cst_26 {dimension_numbers = #tpu.dot_dimension_numbers<[1], [0], [0], [1], [0, 0, 1, 1], [], []>} : vector<8x8xf32>, vector<8x128xf32>, vector<8x128xf32> -> vector<8x128xf32>
    %22 = arith.addf %16, %21 : vector<8x128xf32>
    %23 = tpu.transpose %22, [1, 0] : vector<8x128xf32> -> vector<128x8xf32>
    %c0_27 = arith.constant 0 : index
    %c0_28 = arith.constant 0 : index
    %c0_29 = arith.constant 0 : index
    %24 = vector.load %arg4[%c0_27, %c0_28, %c0_29] : memref<1x128x8xf32, #tpu.memory_space<vmem>>, vector<1x128x8xf32>
    %25 = vector.shape_cast %24 : vector<1x128x8xf32> to vector<128x8xf32>
    %26 = vector.shape_cast %23 : vector<128x8xf32> to vector<1x128x8xf32>
    tpu.vector_store %arg4[%c0_27, %c0_28, %c0_29], %26 {strides = array<i32>} : memref<1x128x8xf32, #tpu.memory_space<vmem>>, vector<1x128x8xf32>,
    return
  }
  func.func @transform_0(%arg0: i32, %arg1: i32) -> (i32, i32, i32, i32) {
    %c0_i32 = arith.constant 0 : i32
    %c0_i32_0 = arith.constant 0 : i32
    %c0_i32_1 = arith.constant 0 : i32
    return %arg0, %c0_i32, %arg1, %c0_i32_0 : i32, i32, i32, i32
  }
  func.func @transform_1(%arg0: i32, %arg1: i32) -> (i32, i32, i32) {
    %c0_i32 = arith.constant 0 : i32
    %c0_i32_0 = arith.constant 0 : i32
    %c0_i32_1 = arith.constant 0 : i32
    %c0_i32_2 = arith.constant 0 : i32
    return %c0_i32, %c0_i32_0, %c0_i32_1 : i32, i32, i32
  }
  func.func @transform_2(%arg0: i32, %arg1: i32) -> (i32, i32, i32) {
    %c0_i32 = arith.constant 0 : i32
    %c0_i32_0 = arith.constant 0 : i32
    return %arg0, %c0_i32, %arg1 : i32, i32, i32
  }
}

</mosaic_0001>

<llo_original>
// kernel: squeeze.2
$region0: #{squeeze.2}
  %s0 = inlined_call_operand.hbm [shape: f32[2,1,4,64], index: 0, kind: input, shape index: {}]
  %s1 = inlined_call_operand.vmem [shape: f32[2,4,8,8], index: 1, kind: output, shape index: {}]
  $region1: #{squeeze.2} parent=0
    #allocation0 [shape = 'u8[4096]{0}', space=vmem, size = 0x1000, scoped, tag = 'operand span for operand 0']
    #allocation1 [shape = 's32[1]{0}', space=sflag, size = 0x4, scoped, tag = 'scoped memory for squeeze.2']
    #allocation2 [shape = 'u8[8192]{0}', space=vmem, size = 0x2000, scoped, tag = 'scoped mem for input reshape']
    %2 = vsyncpa [#allocation1], 0
    %s4 = ssub.s32 128, 128
    %5 = vsyncadd [#allocation1], %s4
    %s7 = sshll.u32 [#allocation0], 4
    %s8 = int_to_ptr.vmem [resolvable:$true] %s7
    %10 = dma.hbm_to_vmem [thread:$0]  %s0, 128, %s8, [#allocation1]
    %11 = dma.done [#allocation1], 128
    %s13 = sshllo.u32 0, 4
    %s14 = scalar_lea.vmem [#allocation0], 4
    %v15 = vld [vmem:[%s14] sm:%s13]
    %s16 = scalar_lea.vmem [#allocation2], 8
    %17 = vst [vmem:[%s16] sm:%s13] %v15
    %v18 = vld [vmem:[#allocation0] sm:%s13]
    %19 = vst [vmem:[#allocation2] sm:%s13] %v18
    %v20 = vld [vmem:[#allocation2] sm:$0xf]
    %vm21 = vcmask 64512
    %22 = vst.msk [vmem:[%s1] ss:$8 sm:$0xf] %vm21, %v20
    %s23 = scalar_lea.vmem [#allocation2], 8
    %v24 = vld [vmem:[%s23] sm:$0xf]
    %vm25 = vcmask 64512
    %s26 = scalar_lea.vmem %s1, 32
    %27 = vst.msk [vmem:[%s26] ss:$8 sm:$0xf] %vm25, %v24
    %v28 = vld.sshfl [vmem:[#allocation2] sm:$0xff pattern:$0xba983210]
    %29 = vrot.lane.b32.xlu0 %v28, 120
    %v30 = vpop.permute.xlu0 %29
    %vm31 = vcmask 64512
    %s32 = scalar_lea.vmem %s1, 1
    %33 = vst.msk [vmem:[%s32] ss:$8 sm:$0xf] %vm31, %v30
    %s34 = scalar_lea.vmem %s1, 1
    %35 = vst.msk [vmem:[%s34] ss:$8 sm:$0xf0] %vm31, %v30
    %v36 = vld.sshfl [vmem:[#allocation2] sm:$0xff pattern:$0xba983210]
    %37 = vrot.lane.b32.xlu0 %v36, 112
    %v38 = vpop.permute.xlu0 %37
    %vm39 = vcmask 64512
    %s40 = scalar_lea.vmem %s1, 2
    %41 = vst.msk [vmem:[%s40] ss:$8 sm:$0xf] %vm39, %v38
    %s42 = scalar_lea.vmem %s1, 2
    %43 = vst.msk [vmem:[%s42] ss:$8 sm:$0xf0] %vm39, %v38
    %v44 = vld.sshfl [vmem:[#allocation2] sm:$0xff pattern:$0xba983210]
    %45 = vrot.lane.b32.xlu0 %v44, 104
    %v46 = vpop.permute.xlu0 %45
    %vm47 = vcmask 64512
    %s48 = scalar_lea.vmem %s1, 3
    %49 = vst.msk [vmem:[%s48] ss:$8 sm:$0xf] %vm47, %v46
    %s50 = scalar_lea.vmem %s1, 3
    %51 = vst.msk [vmem:[%s50] ss:$8 sm:$0xf0] %vm47, %v46
    %v52 = vld.sshfl [vmem:[#allocation2] sm:$0xff pattern:$0xba983210]
    %53 = vrot.lane.b32.xlu0 %v52, 96
    %v54 = vpop.permute.xlu0 %53
    %vm55 = vcmask 64512
    %s56 = scalar_lea.vmem %s1, 4
    %57 = vst.msk [vmem:[%s56] ss:$8 sm:$0xf] %vm55, %v54
    %s58 = scalar_lea.vmem %s1, 4
    %59 = vst.msk [vmem:[%s58] ss:$8 sm:$0xf0] %vm55, %v54
    %v60 = vld.sshfl [vmem:[#allocation2] sm:$0xff pattern:$0xba983210]
    %61 = vrot.lane.b32.xlu0 %v60, 88
    %v62 = vpop.permute.xlu0 %61
    %vm63 = vcmask 64512
    %s64 = scalar_lea.vmem %s1, 5
    %65 = vst.msk [vmem:[%s64] ss:$8 sm:$0xf] %vm63, %v62
    %s66 = scalar_lea.vmem %s1, 5
    %67 = vst.msk [vmem:[%s66] ss:$8 sm:$0xf0] %vm63, %v62
    %v68 = vld.sshfl [vmem:[#allocation2] sm:$0xff pattern:$0xba983210]
    %69 = vrot.lane.b32.xlu0 %v68, 80
    %v70 = vpop.permute.xlu0 %69
    %vm71 = vcmask 64512
    %s72 = scalar_lea.vmem %s1, 6
    %73 = vst.msk [vmem:[%s72] ss:$8 sm:$0xf] %vm71, %v70
    %s74 = scalar_lea.vmem %s1, 6
    %75 = vst.msk [vmem:[%s74] ss:$8 sm:$0xf0] %vm71, %v70
    %v76 = vld.sshfl [vmem:[#allocation2] sm:$0xff pattern:$0xba983210]
    %77 = vrot.lane.b32.xlu0 %v76, 72
    %v78 = vpop.permute.xlu0 %77
    %vm79 = vcmask 64512
    %s80 = scalar_lea.vmem %s1, 7
    %81 = vst.msk [vmem:[%s80] ss:$8 sm:$0xf] %vm79, %v78
    %s82 = scalar_lea.vmem %s1, 7
    %83 = vst.msk [vmem:[%s82] ss:$8 sm:$0xf0] %vm79, %v78
    %84 = vsyncpa [#allocation1], 1

// kernel: cross_channel_token_embedding.1
$region0: #{cross_channel_token_embedding.1}
  #allocation0 [shape = 'u32[]', space=smem, size = 0x4, offset = 0x4, fixed_abs, tag = 'smem constant byte address 0x4 - core index']
  #allocation1 [shape = 'u32[144,128]{1,0:T(1,128)}', space=vmem, size = 0x12000, scoped, tag = 'internal scratch']
  %s0 = inlined_call_operand.vmem [shape: f32[2,4,8,8], index: 0, kind: input, shape index: {}]
  %s1 = inlined_call_operand.vmem [shape: f32[4,8,128], index: 1, kind: input, shape index: {}]
  %s2 = inlined_call_operand.vmem [shape: f32[2,128,8], index: 2, kind: output, shape index: {}]
  %s3 = sld [smem:[#allocation0]]
  $region41: #{cross_channel_token_embedding.1} parent=0
    _
  %s5 = ssub.s32 1, %s3
  %s6 = scalar_select 0, %s5, %s3
  loop: start=0, step=1, limit=4
  $region2: #{cross_channel_token_embedding.1} parent=0 // loop_pre_header
    _
  $region3: #{cross_channel_token_embedding.1} parent=0 // loop_header
    %s8 = sphi 0, %s12
    %p9 = scmp.ge.s32.totalorder %s8, 4
    %s15 = sphi 0, %s27
    %s16 = sphi 0, %s23
    %s17 = sphi 0, %s15
    %s18 = sphi 0, %s16
    %s19 = sphi 0, %s17
    %s20 = sphi 0, %s18
    %s32 = sphi 0, %s34
    %s35 = sphi 0, %s32
    %s36 = sphi 0, %s35
    %s52 = sphi 0, %s36
    %s56 = sphi 0, %s56
    %s58 = sphi 0, %s56
    %s59 = sphi 0, %s58
    %s73 = sphi 0, %s59
    %s81 = sphi 0, %s83
    %s84 = sphi 0, %s81
    %s85 = sphi 0, %s84
    %s101 = sphi 0, %s85
  $region4: #{cross_channel_token_embedding.1} parent=0 // loop_header_branch
    %11 = sbr.rel (%p9) target = $region8
  $region5: #{cross_channel_token_embedding.1} parent=0 // loop_body
    %s13 = ssub.s32 %s8, 1
    %s14 = ssub.s32 %s8, 2
    %s21 = sadd.s32 1, %s16
    %p22 = scmp.ge.s32.totalorder %s21, 1
    %s23 = scalar_select %p22, 0, %s21
    %s24 = sadd.s32 1, %s15
    %s25 = scalar_select %p22, %s24, %s15
    %p26 = scmp.ge.s32.totalorder %s25, 2
    %s27 = scalar_select %p26, 0, %s25
    %s28 = ssub.s32 %s15, %s27
    %s29 = ssub.s32 %s16, %s23
    %s30 = sor.u32 %s28, %s29
    %p31 = scmp.eq.s32.totalorder %s30, 0
    %s33 = sadd.s32 %s32, 1
    %s34 = scalar_select %p31, %s32, %s33
    %p37 = pneg %p31
    %p38 = scmp.eq.s32.totalorder %s8, 1
    %p39 = por %p37, %p38
    %p40 = scmp.ne.s32.totalorder %s32, %s35
    %p41 = scmp.eq.s32.totalorder %s8, 0
    %p42 = por %p40, %p41
    %p43 = scmp.ne.s32.totalorder %s32, %s35
    %p44 = scmp.eq.s32.totalorder %s13, 1
    %p45 = por %p43, %p44
    %p46 = scmp.ne.s32.totalorder %s35, %s36
    %p47 = scmp.eq.s32.totalorder %s13, 0
    %p48 = por %p46, %p47
    %p49 = scmp.ne.s32.totalorder %s35, %s36
    %p50 = scmp.eq.s32.totalorder %s14, 1
    %p51 = por %p49, %p50
    %p53 = scmp.ne.s32.totalorder %s36, %s52
    %p54 = scmp.eq.s32.totalorder %s14, 0
    %p55 = por %p53, %p54
    %s57 = sadd.s32 %s56, 1
    %p60 = scmp.eq.s32.totalorder %s8, 1
    %p61 = scmp.ne.s32.totalorder %s56, %s58
    %p62 = scmp.eq.s32.totalorder %s8, 0
    %p63 = por %p61, %p62
    %p64 = scmp.ne.s32.totalorder %s56, %s58
    %p65 = scmp.eq.s32.totalorder %s13, 1
    %p66 = por %p64, %p65
    %p67 = scmp.ne.s32.totalorder %s58, %s59
    %p68 = scmp.eq.s32.totalorder %s13, 0
    %p69 = por %p67, %p68
    %p70 = scmp.ne.s32.totalorder %s58, %s59
    %p71 = scmp.eq.s32.totalorder %s14, 1
    %p72 = por %p70, %p71
    %p74 = scmp.ne.s32.totalorder %s59, %s73
    %p75 = scmp.eq.s32.totalorder %s14, 0
    %p76 = por %p74, %p75
    %s77 = ssub.s32 %s15, %s27
    %s78 = ssub.s32 %s16, %s23
    %s79 = sor.u32 %s77, %s78
    %p80 = scmp.eq.s32.totalorder %s79, 0
    %s82 = sadd.s32 %s81, 1
    %s83 = scalar_select %p80, %s81, %s82
    %p86 = pneg %p80
    %p87 = scmp.eq.s32.totalorder %s8, 1
    %p88 = por %p86, %p87
    %p89 = scmp.ne.s32.totalorder %s81, %s84
    %p90 = scmp.eq.s32.totalorder %s8, 0
    %p91 = por %p89, %p90
    %p92 = scmp.ne.s32.totalorder %s81, %s84
    %p93 = scmp.eq.s32.totalorder %s13, 1
    %p94 = por %p92, %p93
    %p95 = scmp.ne.s32.totalorder %s84, %s85
    %p96 = scmp.eq.s32.totalorder %s13, 0
    %p97 = por %p95, %p96
    %p98 = scmp.ne.s32.totalorder %s84, %s85
    %p99 = scmp.eq.s32.totalorder %s14, 1
    %p100 = por %p98, %p99
    %p102 = scmp.ne.s32.totalorder %s85, %s101
    %p103 = scmp.eq.s32.totalorder %s14, 0
    %p104 = por %p102, %p103
    %p105 = scmp.le.s32.totalorder 1, %s8
    %p106 = scmp.lt.s32.totalorder %s8, 3
    %p107 = pnand %p105, %p106
    %p108 = pneg %p107
    // Predicated region
    $region9: #{cross_channel_token_embedding.1} parent=5 // pred_check
      _
    $region10: #{cross_channel_token_embedding.1} parent=5 // pred_check_branch
      %110 = sbr.rel (%p107) target = $region12
    $region11: #{cross_channel_token_embedding.1} parent=5 // pred_region
      %s111 = ssub.s32 %s8, 1
      // Predicated region
      $region13: #{cross_channel_token_embedding.1} parent=11 // pred_check
        %p112 = pneg %p69
      $region14: #{cross_channel_token_embedding.1} parent=11 // pred_check_branch
        %114 = sbr.rel (%p112) target = $region16
      $region15: #{cross_channel_token_embedding.1} parent=11 // pred_region
        _
      $region16: #{cross_channel_token_embedding.1} parent=11 // pred_fallthru
        _
    $region12: #{cross_channel_token_embedding.1} parent=5 // pred_fallthru
      _
    %p115 = scmp.lt.s32.totalorder %s8, 2
    // Predicated region
    $region17: #{cross_channel_token_embedding.1} parent=5 // pred_check
      %p116 = pneg %p115
    $region18: #{cross_channel_token_embedding.1} parent=5 // pred_check_branch
      %118 = sbr.rel (%p116) target = $region20
    $region19: #{cross_channel_token_embedding.1} parent=5 // pred_region
      // Predicated region
      $region21: #{cross_channel_token_embedding.1} parent=19 // pred_check
        %p119 = pneg %p42
      $region22: #{cross_channel_token_embedding.1} parent=19 // pred_check_branch
        %121 = sbr.rel (%p119) target = $region24
      $region23: #{cross_channel_token_embedding.1} parent=19 // pred_region
        %p122 = scmp.lt.s32.totalorder %s15, 1
        %s123 = scalar_select %p122, %s15, 1
        %p124 = scmp.lt.s32.totalorder %s16, 0
        %s125 = scalar_select %p124, %s16, 0
        %s126 = smul.addr %s123, 4
        %s127 = sadd.s32 %s125, %s126
        %s128 = smul.addr %s127, 8
        %s129 = scalar_lea.vmem %s0, %s128
      $region24: #{cross_channel_token_embedding.1} parent=19 // pred_fallthru
        _
    $region20: #{cross_channel_token_embedding.1} parent=5 // pred_fallthru
      _
    %p130 = scmp.le.s32.totalorder 1, %s8
    %p131 = scmp.lt.s32.totalorder %s8, 3
    %p132 = pnand %p130, %p131
    %p133 = pneg %p132
    // Predicated region
    $region25: #{cross_channel_token_embedding.1} parent=5 // pred_check
      _
    $region26: #{cross_channel_token_embedding.1} parent=5 // pred_check_branch
      %135 = sbr.rel (%p132) target = $region28
    $region27: #{cross_channel_token_embedding.1} parent=5 // pred_region
      %s136 = ssub.s32 %s8, 1
      %p137 = scmp.lt.s32.totalorder %s17, 1
      %s138 = scalar_select %p137, %s17, 1
      %p139 = scmp.lt.s32.totalorder %s18, 0
      %s140 = scalar_select %p139, %s18, 0
      %s141 = smul.addr %s138, 4
      %s142 = sadd.s32 %s140, %s141
      %s143 = smul.addr %s142, 8
      %s144 = scalar_lea.vmem %s0, %s143
      %p145 = pneg %p48
      %p146 = pneg %p45
      %p147 = pneg %p69
      %p148 = pneg %p66
      %p149 = pneg %p97
      %p150 = pneg %p94
      %p151 = scmp.lt.s32.totalorder %s17, 1
      %s152 = scalar_select %p151, %s17, 1
      %p153 = scmp.lt.s32.totalorder %s18, 0
      %s154 = scalar_select %p153, %s18, 0
      %s155 = smul.addr %s152, 16
      %s156 = sadd.s32 %s154, %s155
      %s157 = smul.addr %s156, 8
      %s158 = scalar_lea.vmem %s2, %s157
      %p159 = scmp.lt.s32.totalorder %s17, 1
      %s160 = scalar_select %p159, %s17, 1
      %p161 = scmp.lt.s32.totalorder %s18, 0
      %s162 = scalar_select %p161, %s18, 0
      %s163 = smul.addr %s160, 4
      %s164 = sadd.s32 %s162, %s163
      %s165 = smul.addr %s164, 8
      %s166 = scalar_lea.vmem %s0, %s165
      %p167 = scmp.lt.s32.totalorder %s17, 1
      %s168 = scalar_select %p167, %s17, 1
      %p169 = scmp.lt.s32.totalorder %s18, 0
      %s170 = scalar_select %p169, %s18, 0
      %s171 = smul.addr %s168, 16
      %s172 = sadd.s32 %s170, %s171
      %s173 = smul.addr %s172, 8
      %s174 = scalar_lea.vmem %s2, %s173
      %v175 = vld [vmem:[%s166] sm:$0xff]
      %v176 = vld [vmem:[%s1] sm:$0xff]
      %s177 = scalar_lea.vmem %s166, 8
      %v178 = vld [vmem:[%s177] sm:$0xff]
      %s179 = scalar_lea.vmem %s1, 8
      %v180 = vld [vmem:[%s179] sm:$0xff]
      %vm181 = vcmask 64512
      %v183 = vsel %vm181, %v178, 0
      %185 = vmatprep.subr.mxu0 0.0
      %186 = vmatpush1.msra.mxu0 %v180
      %187 = vmatprep.subr.mxu0 0.0
      %188 = vmatpush1.msra.mxu0 0.0
      %189 = vmatprep.subr.mxu0 0.0
      %190 = vmatpush1.msra.mxu0 0.0
      %191 = vmatprep.subr.mxu0 0.0
      %192 = vmatpush1.msra.mxu0 0.0
      %193 = vmatprep.subr.mxu0 0.0
      %194 = vmatpush1.msra.mxu0 0.0
      %195 = vmatprep.subr.mxu0 0.0
      %196 = vmatpush1.msra.mxu0 0.0
      %197 = vmatprep.subr.mxu0 0.0
      %198 = vmatpush1.msra.mxu0 0.0
      %199 = vmatprep.subr.mxu0 0.0
      %200 = vmatpush1.msra.mxu0 0.0
      %201 = vmatprep.subr.mxu0 0.0
      %202 = vmatpush1.msra.mxu0 0.0
      %203 = vmatprep.subr.mxu0 0.0
      %204 = vmatpush1.msra.mxu0 0.0
      %205 = vmatprep.subr.mxu0 0.0
      %206 = vmatpush1.msra.mxu0 0.0
      %207 = vmatprep.subr.mxu0 0.0
      %208 = vmatpush1.msra.mxu0 0.0
      %209 = vmatprep.subr.mxu0 0.0
      %210 = vmatpush1.msra.mxu0 0.0
      %211 = vmatprep.subr.mxu0 0.0
      %212 = vmatpush1.msra.mxu0 0.0
      %213 = vmatprep.subr.mxu0 0.0
      %214 = vmatpush1.msra.mxu0 0.0
      %215 = vmatprep.subr.mxu0 0.0
      %216 = vmatpush1.msra.mxu0 0.0
      %217 = vmatprep.subr.mxu0 0.0
      %218 = vmatpush1.msra.mxu0 0.0
      %219 = vmatprep.subr.mxu0 0.0
      %220 = vmatpush1.msra.mxu0 0.0
      %221 = vmatprep.subr.mxu0 0.0
      %222 = vmatpush1.msra.mxu0 0.0
      %223 = vmatprep.subr.mxu0 0.0
      %224 = vmatpush1.msra.mxu0 0.0
      %225 = vmatprep.subr.mxu0 0.0
      %226 = vmatpush1.msra.mxu0 0.0
      %227 = vmatprep.subr.mxu0 0.0
      %228 = vmatpush1.msra.mxu0 0.0
      %229 = vmatprep.subr.mxu0 0.0
      %230 = vmatpush1.msra.mxu0 0.0
      %231 = vmatprep.subr.mxu0 0.0
      %232 = vmatpush1.msra.mxu0 0.0
      %233 = vmatprep.subr.mxu0 0.0
      %234 = vmatpush1.msra.mxu0 0.0
      %235 = vmatprep.subr.mxu0 0.0
      %236 = vmatpush1.msra.mxu0 0.0
      %237 = vmatprep.subr.mxu0 0.0
      %238 = vmatpush1.msra.mxu0 0.0
      %239 = vmatprep.subr.mxu0 0.0
      %240 = vmatpush1.msra.mxu0 0.0
      %241 = vmatprep.subr.mxu0 0.0
      %242 = vmatpush1.msra.mxu0 0.0
      %243 = vmatprep.subr.mxu0 0.0
      %244 = vmatpush1.msra.mxu0 0.0
      %245 = vmatprep.subr.mxu0 0.0
      %246 = vmatpush1.msra.mxu0 0.0
      %247 = vmatprep.subr.mxu0 0.0
      %248 = vmatpush1.msra.mxu0 0.0
      %249 = vmatprep.mubr.f32.mxu0 0.0
      %250 = vmatmul.mubr.f32.gmra.mrb[0].mxu0 %v183
      %v251 = vpop.f32.mrb[0].mxu0
      %v252 = vadd.f32 0.0, %v251
      %v253 = vpop.f32.mrb[0].mxu0
      %254 = vdwg.mxu0
      %v256 = vsel %vm181, %v175, 0
      %258 = vmatprep.subr.mxu0 0.0
      %259 = vmatpush1.msra.mxu0 %v176
      %260 = vmatprep.subr.mxu0 0.0
      %261 = vmatpush1.msra.mxu0 0.0
      %262 = vmatprep.subr.mxu0 0.0
      %263 = vmatpush1.msra.mxu0 0.0
      %264 = vmatprep.subr.mxu0 0.0
      %265 = vmatpush1.msra.mxu0 0.0
      %266 = vmatprep.subr.mxu0 0.0
      %267 = vmatpush1.msra.mxu0 0.0
      %268 = vmatprep.subr.mxu0 0.0
      %269 = vmatpush1.msra.mxu0 0.0
      %270 = vmatprep.subr.mxu0 0.0
      %271 = vmatpush1.msra.mxu0 0.0
      %272 = vmatprep.subr.mxu0 0.0
      %273 = vmatpush1.msra.mxu0 0.0
      %274 = vmatprep.subr.mxu0 0.0
      %275 = vmatpush1.msra.mxu0 0.0
      %276 = vmatprep.subr.mxu0 0.0
      %277 = vmatpush1.msra.mxu0 0.0
      %278 = vmatprep.subr.mxu0 0.0
      %279 = vmatpush1.msra.mxu0 0.0
      %280 = vmatprep.subr.mxu0 0.0
      %281 = vmatpush1.msra.mxu0 0.0
      %282 = vmatprep.subr.mxu0 0.0
      %283 = vmatpush1.msra.mxu0 0.0
      %284 = vmatprep.subr.mxu0 0.0
      %285 = vmatpush1.msra.mxu0 0.0
      %286 = vmatprep.subr.mxu0 0.0
      %287 = vmatpush1.msra.mxu0 0.0
      %288 = vmatprep.subr.mxu0 0.0
      %289 = vmatpush1.msra.mxu0 0.0
      %290 = vmatprep.subr.mxu0 0.0
      %291 = vmatpush1.msra.mxu0 0.0
      %292 = vmatprep.subr.mxu0 0.0
      %293 = vmatpush1.msra.mxu0 0.0
      %294 = vmatprep.subr.mxu0 0.0
      %295 = vmatpush1.msra.mxu0 0.0
      %296 = vmatprep.subr.mxu0 0.0
      %297 = vmatpush1.msra.mxu0 0.0
      %298 = vmatprep.subr.mxu0 0.0
      %299 = vmatpush1.msra.mxu0 0.0
      %300 = vmatprep.subr.mxu0 0.0
      %301 = vmatpush1.msra.mxu0 0.0
      %302 = vmatprep.subr.mxu0 0.0
      %303 = vmatpush1.msra.mxu0 0.0
      %304 = vmatprep.subr.mxu0 0.0
      %305 = vmatpush1.msra.mxu0 0.0
      %306 = vmatprep.subr.mxu0 0.0
      %307 = vmatpush1.msra.mxu0 0.0
      %308 = vmatprep.subr.mxu0 0.0
      %309 = vmatpush1.msra.mxu0 0.0
      %310 = vmatprep.subr.mxu0 0.0
      %311 = vmatpush1.msra.mxu0 0.0
      %312 = vmatprep.subr.mxu0 0.0
      %313 = vmatpush1.msra.mxu0 0.0
      %314 = vmatprep.subr.mxu0 0.0
      %315 = vmatpush1.msra.mxu0 0.0
      %316 = vmatprep.subr.mxu0 0.0
      %317 = vmatpush1.msra.mxu0 0.0
      %318 = vmatprep.subr.mxu0 0.0
      %319 = vmatpush1.msra.mxu0 0.0
      %320 = vmatprep.subr.mxu0 0.0
      %321 = vmatpush1.msra.mxu0 0.0
      %322 = vmatprep.mubr.f32.mxu0 0.0
      %323 = vmatmul.mubr.f32.gmra.mrb[0].mxu0 %v256
      %v324 = vpop.f32.mrb[0].mxu0
      %v325 = vadd.f32 %v252, %v324
      %v326 = vpop.f32.mrb[0].mxu0
      %327 = vdwg.mxu0
      %s328 = scalar_lea.vmem %s166, 16
      %v329 = vld [vmem:[%s328] sm:$0xff]
      %s330 = scalar_lea.vmem %s1, 16
      %v331 = vld [vmem:[%s330] sm:$0xff]
      %v333 = vsel %vm181, %v329, 0
      %335 = vmatprep.subr.mxu0 0.0
      %336 = vmatpush1.msra.mxu0 %v331
      %337 = vmatprep.subr.mxu0 0.0
      %338 = vmatpush1.msra.mxu0 0.0
      %339 = vmatprep.subr.mxu0 0.0
      %340 = vmatpush1.msra.mxu0 0.0
      %341 = vmatprep.subr.mxu0 0.0
      %342 = vmatpush1.msra.mxu0 0.0
      %343 = vmatprep.subr.mxu0 0.0
      %344 = vmatpush1.msra.mxu0 0.0
      %345 = vmatprep.subr.mxu0 0.0
      %346 = vmatpush1.msra.mxu0 0.0
      %347 = vmatprep.subr.mxu0 0.0
      %348 = vmatpush1.msra.mxu0 0.0
      %349 = vmatprep.subr.mxu0 0.0
      %350 = vmatpush1.msra.mxu0 0.0
      %351 = vmatprep.subr.mxu0 0.0
      %352 = vmatpush1.msra.mxu0 0.0
      %353 = vmatprep.subr.mxu0 0.0
      %354 = vmatpush1.msra.mxu0 0.0
      %355 = vmatprep.subr.mxu0 0.0
      %356 = vmatpush1.msra.mxu0 0.0
      %357 = vmatprep.subr.mxu0 0.0
      %358 = vmatpush1.msra.mxu0 0.0
      %359 = vmatprep.subr.mxu0 0.0
      %360 = vmatpush1.msra.mxu0 0.0
      %361 = vmatprep.subr.mxu0 0.0
      %362 = vmatpush1.msra.mxu0 0.0
      %363 = vmatprep.subr.mxu0 0.0
      %364 = vmatpush1.msra.mxu0 0.0
      %365 = vmatprep.subr.mxu0 0.0
      %366 = vmatpush1.msra.mxu0 0.0
      %367 = vmatprep.subr.mxu0 0.0
      %368 = vmatpush1.msra.mxu0 0.0
      %369 = vmatprep.subr.mxu0 0.0
      %370 = vmatpush1.msra.mxu0 0.0
      %371 = vmatprep.subr.mxu0 0.0
      %372 = vmatpush1.msra.mxu0 0.0
      %373 = vmatprep.subr.mxu0 0.0
      %374 = vmatpush1.msra.mxu0 0.0
      %375 = vmatprep.subr.mxu0 0.0
      %376 = vmatpush1.msra.mxu0 0.0
      %377 = vmatprep.subr.mxu0 0.0
      %378 = vmatpush1.msra.mxu0 0.0
      %379 = vmatprep.subr.mxu0 0.0
      %380 = vmatpush1.msra.mxu0 0.0
      %381 = vmatprep.subr.mxu0 0.0
      %382 = vmatpush1.msra.mxu0 0.0
      %383 = vmatprep.subr.mxu0 0.0
      %384 = vmatpush1.msra.mxu0 0.0
      %385 = vmatprep.subr.mxu0 0.0
      %386 = vmatpush1.msra.mxu0 0.0
      %387 = vmatprep.subr.mxu0 0.0
      %388 = vmatpush1.msra.mxu0 0.0
      %389 = vmatprep.subr.mxu0 0.0
      %390 = vmatpush1.msra.mxu0 0.0
      %391 = vmatprep.subr.mxu0 0.0
      %392 = vmatpush1.msra.mxu0 0.0
      %393 = vmatprep.subr.mxu0 0.0
      %394 = vmatpush1.msra.mxu0 0.0
      %395 = vmatprep.subr.mxu0 0.0
      %396 = vmatpush1.msra.mxu0 0.0
      %397 = vmatprep.subr.mxu0 0.0
      %398 = vmatpush1.msra.mxu0 0.0
      %399 = vmatprep.mubr.f32.mxu0 0.0
      %400 = vmatmul.mubr.f32.gmra.mrb[0].mxu0 %v333
      %v401 = vpop.f32.mrb[0].mxu0
      %v402 = vadd.f32 0.0, %v401
      %v403 = vpop.f32.mrb[0].mxu0
      %404 = vdwg.mxu0
      %v405 = vadd.f32 %v325, %v402
      %s406 = scalar_lea.vmem %s166, 24
      %v407 = vld [vmem:[%s406] sm:$0xff]
      %s408 = scalar_lea.vmem %s1, 24
      %v409 = vld [vmem:[%s408] sm:$0xff]
      %v411 = vsel %vm181, %v407, 0
      %413 = vmatprep.subr.mxu0 0.0
      %414 = vmatpush1.msra.mxu0 %v409
      %415 = vmatprep.subr.mxu0 0.0
      %416 = vmatpush1.msra.mxu0 0.0
      %417 = vmatprep.subr.mxu0 0.0
      %418 = vmatpush1.msra.mxu0 0.0
      %419 = vmatprep.subr.mxu0 0.0
      %420 = vmatpush1.msra.mxu0 0.0
      %421 = vmatprep.subr.mxu0 0.0
      %422 = vmatpush1.msra.mxu0 0.0
      %423 = vmatprep.subr.mxu0 0.0
      %424 = vmatpush1.msra.mxu0 0.0
      %425 = vmatprep.subr.mxu0 0.0
      %426 = vmatpush1.msra.mxu0 0.0
      %427 = vmatprep.subr.mxu0 0.0
      %428 = vmatpush1.msra.mxu0 0.0
      %429 = vmatprep.subr.mxu0 0.0
      %430 = vmatpush1.msra.mxu0 0.0
      %431 = vmatprep.subr.mxu0 0.0
      %432 = vmatpush1.msra.mxu0 0.0
      %433 = vmatprep.subr.mxu0 0.0
      %434 = vmatpush1.msra.mxu0 0.0
      %435 = vmatprep.subr.mxu0 0.0
      %436 = vmatpush1.msra.mxu0 0.0
      %437 = vmatprep.subr.mxu0 0.0
      %438 = vmatpush1.msra.mxu0 0.0
      %439 = vmatprep.subr.mxu0 0.0
      %440 = vmatpush1.msra.mxu0 0.0
      %441 = vmatprep.subr.mxu0 0.0
      %442 = vmatpush1.msra.mxu0 0.0
      %443 = vmatprep.subr.mxu0 0.0
      %444 = vmatpush1.msra.mxu0 0.0
      %445 = vmatprep.subr.mxu0 0.0
      %446 = vmatpush1.msra.mxu0 0.0
      %447 = vmatprep.subr.mxu0 0.0
      %448 = vmatpush1.msra.mxu0 0.0
      %449 = vmatprep.subr.mxu0 0.0
      %450 = vmatpush1.msra.mxu0 0.0
      %451 = vmatprep.subr.mxu0 0.0
      %452 = vmatpush1.msra.mxu0 0.0
      %453 = vmatprep.subr.mxu0 0.0
      %454 = vmatpush1.msra.mxu0 0.0
      %455 = vmatprep.subr.mxu0 0.0
      %456 = vmatpush1.msra.mxu0 0.0
      %457 = vmatprep.subr.mxu0 0.0
      %458 = vmatpush1.msra.mxu0 0.0
      %459 = vmatprep.subr.mxu0 0.0
      %460 = vmatpush1.msra.mxu0 0.0
      %461 = vmatprep.subr.mxu0 0.0
      %462 = vmatpush1.msra.mxu0 0.0
      %463 = vmatprep.subr.mxu0 0.0
      %464 = vmatpush1.msra.mxu0 0.0
      %465 = vmatprep.subr.mxu0 0.0
      %466 = vmatpush1.msra.mxu0 0.0
      %467 = vmatprep.subr.mxu0 0.0
      %468 = vmatpush1.msra.mxu0 0.0
      %469 = vmatprep.subr.mxu0 0.0
      %470 = vmatpush1.msra.mxu0 0.0
      %471 = vmatprep.subr.mxu0 0.0
      %472 = vmatpush1.msra.mxu0 0.0
      %473 = vmatprep.subr.mxu0 0.0
      %474 = vmatpush1.msra.mxu0 0.0
      %475 = vmatprep.subr.mxu0 0.0
      %476 = vmatpush1.msra.mxu0 0.0
      %477 = vmatprep.mubr.f32.mxu0 0.0
      %478 = vmatmul.mubr.f32.gmra.mrb[0].mxu0 %v411
      %v479 = vpop.f32.mrb[0].mxu0
      %v480 = vadd.f32 0.0, %v479
      %v481 = vpop.f32.mrb[0].mxu0
      %482 = vdwg.mxu0
      %v483 = vadd.f32 %v405, %v480
      %484 = vxpose.xlu0.b32.start [1/16] %v483, 128
      %485 = vxpose.xlu0.b32.cont [2/16] 0.0, 128
      %486 = vxpose.xlu0.b32.cont [3/16] 0.0, 128
      %487 = vxpose.xlu0.b32.cont [4/16] 0.0, 128
      %488 = vxpose.xlu0.b32.cont [5/16] 0.0, 128
      %489 = vxpose.xlu0.b32.cont [6/16] 0.0, 128
      %490 = vxpose.xlu0.b32.cont [7/16] 0.0, 128
      %491 = vxpose.xlu0.b32.cont [8/16] 0.0, 128
      %492 = vxpose.xlu0.b32.cont [9/16] 0.0, 128
      %493 = vxpose.xlu0.b32.cont [10/16] 0.0, 128
      %494 = vxpose.xlu0.b32.cont [11/16] 0.0, 128
      %495 = vxpose.xlu0.b32.cont [12/16] 0.0, 128
      %496 = vxpose.xlu0.b32.cont [13/16] 0.0, 128
      %497 = vxpose.xlu0.b32.cont [14/16] 0.0, 128
      %498 = vxpose.xlu0.b32.cont [15/16] 0.0, 128
      %499 = vxpose.xlu0.b32.end [16/16] 0.0, 128
      %v500 = vpop.trf.xlu0
      %v501 = vpop.trf.xlu0
      %v502 = vpop.trf.xlu0
      %v503 = vpop.trf.xlu0
      %v504 = vpop.trf.xlu0
      %v505 = vpop.trf.xlu0
      %v506 = vpop.trf.xlu0
      %v507 = vpop.trf.xlu0
      %v508 = vpop.trf.xlu0
      %v509 = vpop.trf.xlu0
      %v510 = vpop.trf.xlu0
      %v511 = vpop.trf.xlu0
      %v512 = vpop.trf.xlu0
      %v513 = vpop.trf.xlu0
      %v514 = vpop.trf.xlu0
      %v515 = vpop.trf.xlu0
      %516 = vst.msk [vmem:[%s174] sm:$0xff] %vm181, %v500
      %517 = vst.msk [vmem:[%s174 + $0x8] sm:$0xff] %vm181, %v501
      %518 = vst.msk [vmem:[%s174 + $0x10] sm:$0xff] %vm181, %v502
      %519 = vst.msk [vmem:[%s174 + $0x18] sm:$0xff] %vm181, %v503
      %520 = vst.msk [vmem:[%s174 + $0x20] sm:$0xff] %vm181, %v504
      %521 = vst.msk [vmem:[%s174 + $0x28] sm:$0xff] %vm181, %v505
      %522 = vst.msk [vmem:[%s174 + $0x30] sm:$0xff] %vm181, %v506
      %523 = vst.msk [vmem:[%s174 + $0x38] sm:$0xff] %vm181, %v507
      %524 = vst.msk [vmem:[%s174 + $0x40] sm:$0xff] %vm181, %v508
      %525 = vst.msk [vmem:[%s174 + $0x48] sm:$0xff] %vm181, %v509
      %526 = vst.msk [vmem:[%s174 + $0x50] sm:$0xff] %vm181, %v510
      %527 = vst.msk [vmem:[%s174 + $0x58] sm:$0xff] %vm181, %v511
      %528 = vst.msk [vmem:[%s174 + $0x60] sm:$0xff] %vm181, %v512
      %529 = vst.msk [vmem:[%s174 + $0x68] sm:$0xff] %vm181, %v513
      %530 = vst.msk [vmem:[%s174 + $0x70] sm:$0xff] %vm181, %v514
      %531 = vst.msk [vmem:[%s174 + $0x78] sm:$0xff] %vm181, %v515
      %p532 = scmp.lt.s32.totalorder %s17, 1
      %s533 = scalar_select %p532, %s17, 1
      %p534 = scmp.lt.s32.totalorder %s18, 0
      %s535 = scalar_select %p534, %s18, 0
      %s536 = smul.addr %s533, 16
      %s537 = sadd.s32 %s535, %s536
      %s538 = smul.addr %s537, 8
      %s539 = scalar_lea.vmem %s2, %s538
      // Predicated region
      $region29: #{cross_channel_token_embedding.1} parent=27 // pred_check
        %p540 = pneg %p94
      $region30: #{cross_channel_token_embedding.1} parent=27 // pred_check_branch
        %542 = sbr.rel (%p540) target = $region32
      $region31: #{cross_channel_token_embedding.1} parent=27 // pred_region
        _
      $region32: #{cross_channel_token_embedding.1} parent=27 // pred_fallthru
        _
    $region28: #{cross_channel_token_embedding.1} parent=5 // pred_fallthru
      _
    %p543 = scmp.le.s32.totalorder 2, %s8
    // Predicated region
    $region33: #{cross_channel_token_embedding.1} parent=5 // pred_check
      %p544 = pneg %p543
    $region34: #{cross_channel_token_embedding.1} parent=5 // pred_check_branch
      %546 = sbr.rel (%p544) target = $region36
    $region35: #{cross_channel_token_embedding.1} parent=5 // pred_region
      %s547 = ssub.s32 %s8, 2
      // Predicated region
      $region37: #{cross_channel_token_embedding.1} parent=35 // pred_check
        %p548 = pneg %p100
      $region38: #{cross_channel_token_embedding.1} parent=35 // pred_check_branch
        %550 = sbr.rel (%p548) target = $region40
      $region39: #{cross_channel_token_embedding.1} parent=35 // pred_region
        %p551 = scmp.lt.s32.totalorder %s19, 1
        %s552 = scalar_select %p551, %s19, 1
        %p553 = scmp.lt.s32.totalorder %s20, 0
        %s554 = scalar_select %p553, %s20, 0
        %s555 = smul.addr %s552, 16
        %s556 = sadd.s32 %s554, %s555
        %s557 = smul.addr %s556, 8
        %s558 = scalar_lea.vmem %s2, %s557
      $region40: #{cross_channel_token_embedding.1} parent=35 // pred_fallthru
        _
    $region36: #{cross_channel_token_embedding.1} parent=5 // pred_fallthru
      _
  $region6: #{cross_channel_token_embedding.1} parent=0 // loop_footer
    %s12 = sadd.s32 1, %s8
  $region7: #{cross_channel_token_embedding.1} parent=0 // loop_footer_branch
    %7 = sbr.rel target = $region3
  $region8: #{cross_channel_token_embedding.1} parent=0 // loop_exit
    _

</llo_original>
